<compile_context>
chip_gen: v7x
topology: tpu7x:2x2x1
jax: 0.10.0
libtpu: 0.0.40
codegen_flags: <defaults>
</compile_context>

<pallas_src>
import jax
import jax.numpy as jnp
from jax.experimental import pallas as pl
from jax.experimental.pallas import tpu as pltpu


def _round_up(a: int, m: int) -> int:
    return (a + m - 1) // m * m


def _net_kernel(x_ref, w1_ref, b1_ref, w2_ref, o_ref):
    # x tile: [tile_rows, p*n]  (p original rows packed per lane-row)
    x = x_ref[...].astype(jnp.bfloat16)
    # Hidden layer (block-diagonal weights): [tile_rows, p*n] @ [p*n, p*H] -> f32
    h = jnp.dot(x, w1_ref[...], preferred_element_type=jnp.float32)
    # Bias add in f32, tanh in bf16 (EUP bf16 path on v6e/v7x; h is already the
    # bf16 operand the second matmul needs).
    h = jnp.tanh((h + b1_ref[...]).astype(jnp.bfloat16))
    # Output layer (block-diagonal, no bias): [tile_rows, p*H] @ [p*H, 2p] -> f32
    o_ref[...] = jnp.dot(h, w2_ref[...], preferred_element_type=jnp.float32)


def net_forward(x, w1bd, b1bd, w2bd, *, tile_rows: int = 2048):
    """Forward pass of Net.

    x:     [B, n]        any float dtype (bf16 preferred if the producer can)
    w1bd:  [p*n, p*H]    bf16 block-diagonal dense1 weight (H = 6n)
    b1bd:  [1, p*H]      f32  tiled dense1 bias
    w2bd:  [p*H, 2*p]    bf16 block-diagonal dense6 weight
    returns [B, 2] f32
    """
    B, n = x.shape
    pn, pH = w1bd.shape
    p = pn // n
    assert p * n == pn and b1bd.shape == (1, pH) and w2bd.shape == (pH, 2 * p)

    # Row-pack: only pads (one copy of x) when B is not a multiple of p.
    Bp = _round_up(B, p)
    if Bp != B:
        x = jnp.pad(x, ((0, Bp - B), (0, 0)))
    NP = Bp // p
    xp = x.reshape(NP, pn)  # contiguous reshape -> free

    # Tile selection: big tiles to amortize per-step overhead, but keep >=2 grid
    # steps when possible so the "parallel" batch axis can use both v7x cores.
    if NP <= 8:
        tr = NP                                   # single full block (no OOB)
    else:
        tr = min(tile_rows, _round_up(pl.cdiv(NP, 2), 8))
    grid = (pl.cdiv(NP, tr),)

    out_p = pl.pallas_call(
        _net_kernel,
        out_shape=jax.ShapeDtypeStruct((NP, 2 * p), jnp.float32),
        grid=grid,
        in_specs=[
            pl.BlockSpec((tr, pn), lambda i: (i, 0)),        # x: streamed tiles
            pl.BlockSpec((pn, pH), lambda i: (0, 0)),        # W1bd: resident
            pl.BlockSpec((1, pH), lambda i: (0, 0)),         # b1:  resident
            pl.BlockSpec((pH, 2 * p), lambda i: (0, 0)),     # W2bd: resident
        ],
        out_specs=pl.BlockSpec((tr, 2 * p), lambda i: (i, 0)),
        compiler_params=pltpu.CompilerParams(
            dimension_semantics=("parallel",),
            vmem_limit_bytes=32 * 1024 * 1024,
        ),
    )(xp, w1bd, b1bd, w2bd)

    out = out_p.reshape(Bp, 2)  # contiguous reshape -> free
    return out if Bp == B else out[:B]


def init_params(key, n: int):
    """PyTorch-layout params matching the module's init.

    dense1.weight [6n, n] ~ N(0, 0.01); dense1.bias [6n] ~ N(0, 0.02)
    dense6.weight [2, 6n] ~ U(-1/sqrt(6n), 1/sqrt(6n)) (PyTorch default, no bias)
    """
    h = 6 * n
    k1, k2, k3 = jax.random.split(key, 3)
    w1 = 0.01 * jax.random.normal(k1, (h, n), dtype=jnp.float32)
    b1 = 0.02 * jax.random.normal(k2, (h,), dtype=jnp.float32)
    bound = 1.0 / jnp.sqrt(jnp.float32(h))
    w2 = jax.random.uniform(k3, (2, h), dtype=jnp.float32,
                            minval=-bound, maxval=bound)
    return w1, b1, w2


def prepare_params(w1, b1, w2):
    """Pack PyTorch-layout params into the row-packed block-diagonal layout.

    p = max(1, 128 // n) rows packed per lane-row.  Returns
      w1bd [p*n, p*H] bf16,  b1bd [1, p*H] f32,  w2bd [p*H, 2p] bf16
    with block k holding W1^T / b1 / W2^T for the k-th packed row.  Off-diagonal
    blocks are exactly zero, so results match the unpacked module.
    """
    H, n = w1.shape
    p = max(1, 128 // n)
    w1t = w1.T  # [n, H]
    w2t = w2.T  # [H, 2]
    w1bd = jnp.zeros((p * n, p * H), jnp.float32)
    w2bd = jnp.zeros((p * H, 2 * p), jnp.float32)
    for k in range(p):
        w1bd = w1bd.at[k * n:(k + 1) * n, k * H:(k + 1) * H].set(w1t)
        w2bd = w2bd.at[k * H:(k + 1) * H, 2 * k:2 * (k + 1)].set(w2t)
    b1bd = jnp.tile(b1.reshape(1, H), (1, p)).astype(jnp.float32)
    return w1bd.astype(jnp.bfloat16), b1bd, w2bd.astype(jnp.bfloat16)


def reference_forward(x, w1, b1, w2):
    """Pure-JAX reference of the PyTorch module, emulating the kernel's
    bf16 operand rounding (f32 accumulation, f32 bias add, bf16 tanh)."""
    xb = x.astype(jnp.bfloat16)
    h = jnp.dot(xb, w1.T.astype(jnp.bfloat16),
                preferred_element_type=jnp.float32) + b1
    h = jnp.tanh(h.astype(jnp.bfloat16))
    return jnp.dot(h, w2.T.astype(jnp.bfloat16),
                   preferred_element_type=jnp.float32)


if __name__ == "__main__":
    n = 16        # number of spins
    batch = 64    # small demo batch (8 packed rows -> one grid step)

    key = jax.random.PRNGKey(0)
    kx, kp = jax.random.split(key)
    # Spin configurations in {-1, +1}, as f32 (ℝⁿ input, like the module).
    x = jnp.where(
        jax.random.bernoulli(kx, 0.5, (batch, n)), 1.0, -1.0
    ).astype(jnp.float32)

    w1, b1, w2 = init_params(kp, n)            # PyTorch layouts
    w1bd, b1bd, w2bd = prepare_params(w1, b1, w2)

    out = net_forward(x, w1bd, b1bd, w2bd)
    out = jax.block_until_ready(out)

    ref = reference_forward(x, w1, b1, w2)
    assert out.shape == (batch, 2)
    assert jnp.allclose(out, ref, atol=5e-3, rtol=5e-2), float(
        jnp.max(jnp.abs(out - ref)))

    print("KERNEL_OK")
</pallas_src>

<mosaic_0001>
module attributes {stable_mosaic.version = 11 : i64} {
  func.func @_net_kernel(%arg0: i32, %arg1: memref<8x128xf32, #tpu.memory_space<vmem>>, %arg2: memref<128x768xbf16, #tpu.memory_space<vmem>>, %arg3: memref<1x768xf32, #tpu.memory_space<vmem>>, %arg4: memref<768x16xbf16, #tpu.memory_space<vmem>>, %arg5: memref<8x16xf32, #tpu.memory_space<vmem>>) attributes {dimension_semantics = [#tpu.dimension_semantics<parallel>], iteration_bounds = array<i64: 1>, scalar_prefetch = 0 : i64, scratch_operands = 0 : i64, tpu.core_type = #tpu.core_type<tc>, window_params = [{transform_indices = @transform_0, window_bounds = array<i64: 8, 128>}, {pipeline_mode = #tpu.pipeline_mode<synchronous>, transform_indices = @transform_1, window_bounds = array<i64: 128, 768>}, {pipeline_mode = #tpu.pipeline_mode<synchronous>, transform_indices = @transform_2, window_bounds = array<i64: 1, 768>}, {pipeline_mode = #tpu.pipeline_mode<synchronous>, transform_indices = @transform_3, window_bounds = array<i64: 768, 16>}, {transform_indices = @transform_4, window_bounds = array<i64: 8, 16>}]} {
    %c0 = arith.constant 0 : index
    %c0_0 = arith.constant 0 : index
    %0 = vector.load %arg1[%c0, %c0_0] : memref<8x128xf32, #tpu.memory_space<vmem>>, vector<8x128xf32>
    %1 = arith.truncf %0 : vector<8x128xf32> to vector<8x128xbf16>
    %c0_1 = arith.constant 0 : index
    %c0_2 = arith.constant 0 : index
    %2 = vector.load %arg2[%c0_1, %c0_2] : memref<128x768xbf16, #tpu.memory_space<vmem>>, vector<128x768xbf16>
    %cst = arith.constant dense<0.000000e+00> : vector<8x768xf32>
    %3 = tpu.matmul %1, %2, %cst {dimension_numbers = #tpu.dot_dimension_numbers<[1], [0], [0], [1], [0, 0, 1, 1], [], []>} : vector<8x128xbf16>, vector<128x768xbf16>, vector<8x768xf32> -> vector<8x768xf32>
    %c0_3 = arith.constant 0 : index
    %c0_4 = arith.constant 0 : index
    %4 = vector.load %arg3[%c0_3, %c0_4] : memref<1x768xf32, #tpu.memory_space<vmem>>, vector<1x768xf32>
    %5 = vector.broadcast %4 : vector<1x768xf32> to vector<8x768xf32>
    %6 = arith.addf %3, %5 : vector<8x768xf32>
    %7 = arith.truncf %6 : vector<8x768xf32> to vector<8x768xbf16>
    %8 = math.tanh %7 : vector<8x768xbf16>
    %c0_5 = arith.constant 0 : index
    %c0_6 = arith.constant 0 : index
    %9 = vector.load %arg4[%c0_5, %c0_6] : memref<768x16xbf16, #tpu.memory_space<vmem>>, vector<768x16xbf16>
    %cst_7 = arith.constant dense<0.000000e+00> : vector<8x16xf32>
    %10 = tpu.matmul %8, %9, %cst_7 {dimension_numbers = #tpu.dot_dimension_numbers<[1], [0], [0], [1], [0, 0, 1, 1], [], []>} : vector<8x768xbf16>, vector<768x16xbf16>, vector<8x16xf32> -> vector<8x16xf32>
    %c0_8 = arith.constant 0 : index
    %c0_9 = arith.constant 0 : index
    %11 = vector.load %arg5[%c0_8, %c0_9] : memref<8x16xf32, #tpu.memory_space<vmem>>, vector<8x16xf32>
    tpu.vector_store %arg5[%c0_8, %c0_9], %10 {strides = array<i32>} : memref<8x16xf32, #tpu.memory_space<vmem>>, vector<8x16xf32>,
    return
  }
  func.func @transform_0(%arg0: i32) -> (i32, i32) {
    %c0_i32 = arith.constant 0 : i32
    %c0_i32_0 = arith.constant 0 : i32
    return %arg0, %c0_i32 : i32, i32
  }
  func.func @transform_1(%arg0: i32) -> (i32, i32) {
    %c0_i32 = arith.constant 0 : i32
    %c0_i32_0 = arith.constant 0 : i32
    %c0_i32_1 = arith.constant 0 : i32
    return %c0_i32, %c0_i32_0 : i32, i32
  }
  func.func @transform_2(%arg0: i32) -> (i32, i32) {
    %c0_i32 = arith.constant 0 : i32
    %c0_i32_0 = arith.constant 0 : i32
    %c0_i32_1 = arith.constant 0 : i32
    return %c0_i32, %c0_i32_0 : i32, i32
  }
  func.func @transform_3(%arg0: i32) -> (i32, i32) {
    %c0_i32 = arith.constant 0 : i32
    %c0_i32_0 = arith.constant 0 : i32
    %c0_i32_1 = arith.constant 0 : i32
    return %c0_i32, %c0_i32_0 : i32, i32
  }
  func.func @transform_4(%arg0: i32) -> (i32, i32) {
    %c0_i32 = arith.constant 0 : i32
    %c0_i32_0 = arith.constant 0 : i32
    return %arg0, %c0_i32 : i32, i32
  }
}

</mosaic_0001>

<llo_original>
// kernel: tpu_custom_call.1
$region0: #{tpu_custom_call.1}
  #allocation0 [shape = 'u32[]', space=smem, size = 0x4, offset = 0x4, fixed_abs, tag = 'smem constant byte address 0x4 - core index']
  #allocation1 [shape = 'u32[144,128]{1,0:T(1,128)}', space=vmem, size = 0x12000, scoped, tag = 'internal scratch']
  %s0 = inlined_call_operand.vmem [shape: f32[8,128], index: 0, kind: input, shape index: {}]
  %s1 = inlined_call_operand.vmem [shape: bf16[128,768], index: 1, kind: input, shape index: {}]
  %s2 = inlined_call_operand.vmem [shape: f32[1,768], index: 2, kind: input, shape index: {}]
  %s3 = inlined_call_operand.vmem [shape: bf16[768,16], index: 3, kind: input, shape index: {}]
  %s4 = inlined_call_operand.hbm [shape: f32[8,16], index: 4, kind: output, shape index: {}]
  %s5 = sld [smem:[#allocation0]]
  $region26: #{tpu_custom_call.1} parent=0
    _
  %s7 = ssub.s32 1, %s5
  %s8 = scalar_select 0, %s7, %s5
  $region1: #{tpu_custom_call.1} parent=0
    #allocation2 [shape = 'u8[4096]{0}', space=vmem, size = 0x1000, scoped, tag = 'output window, operand 0, single buffered']
    #allocation3 [shape = 's32[1]{0}', space=sflag, size = 0x4, scoped, tag = 'scoped memory for tpu_custom_call.1']
    %9 = vsyncpa [#allocation3], 0
    // Predicated region
    $region2: #{tpu_custom_call.1} parent=1 // pred_check
      _
    $region3: #{tpu_custom_call.1} parent=1 // pred_check_branch
      %11 = sbr.rel (0) target = $region5
    $region4: #{tpu_custom_call.1} parent=1 // pred_region
      _
    $region5: #{tpu_custom_call.1} parent=1 // pred_fallthru
      _
    // Predicated region
    $region6: #{tpu_custom_call.1} parent=1 // pred_check
      _
    $region7: #{tpu_custom_call.1} parent=1 // pred_check_branch
      %13 = sbr.rel (0) target = $region9
    $region8: #{tpu_custom_call.1} parent=1 // pred_region
      _
    $region9: #{tpu_custom_call.1} parent=1 // pred_fallthru
      _
    // Predicated region
    $region10: #{tpu_custom_call.1} parent=1 // pred_check
      _
    $region11: #{tpu_custom_call.1} parent=1 // pred_check_branch
      %15 = sbr.rel (0) target = $region13
    $region12: #{tpu_custom_call.1} parent=1 // pred_region
      _
    $region13: #{tpu_custom_call.1} parent=1 // pred_fallthru
      _
    // Predicated region
    $region14: #{tpu_custom_call.1} parent=1 // pred_check
      _
    $region15: #{tpu_custom_call.1} parent=1 // pred_check_branch
      %17 = sbr.rel (0) target = $region17
    $region16: #{tpu_custom_call.1} parent=1 // pred_region
      _
    $region17: #{tpu_custom_call.1} parent=1 // pred_fallthru
      _
    %v19 = vld [vmem:[%s0] sm:$0xff]
    %v20 = vpack.c.bf16 %v19, %v19
    %v21 = vld [vmem:[%s1] sm:$0xff]
    %v22 = vld [vmem:[%s1 + $0x8] sm:$0xff]
    %v23 = vld [vmem:[%s1 + $0x10] sm:$0xff]
    %v24 = vld [vmem:[%s1 + $0x18] sm:$0xff]
    %v25 = vld [vmem:[%s1 + $0x20] sm:$0xff]
    %v26 = vld [vmem:[%s1 + $0x28] sm:$0xff]
    %v27 = vld [vmem:[%s1 + $0x30] sm:$0xff]
    %v28 = vld [vmem:[%s1 + $0x38] sm:$0xff]
    %v29 = vld [vmem:[%s1 + $0x40] sm:$0xff]
    %v30 = vld [vmem:[%s1 + $0x48] sm:$0xff]
    %v31 = vld [vmem:[%s1 + $0x50] sm:$0xff]
    %v32 = vld [vmem:[%s1 + $0x58] sm:$0xff]
    %v33 = vld [vmem:[%s1 + $0x60] sm:$0xff]
    %v34 = vld [vmem:[%s1 + $0x68] sm:$0xff]
    %v35 = vld [vmem:[%s1 + $0x70] sm:$0xff]
    %v36 = vld [vmem:[%s1 + $0x78] sm:$0xff]
    %v37 = vld [vmem:[%s1 + $0x80] sm:$0xff]
    %v38 = vld [vmem:[%s1 + $0x88] sm:$0xff]
    %v39 = vld [vmem:[%s1 + $0x90] sm:$0xff]
    %v40 = vld [vmem:[%s1 + $0x98] sm:$0xff]
    %v41 = vld [vmem:[%s1 + $0xa0] sm:$0xff]
    %v42 = vld [vmem:[%s1 + $0xa8] sm:$0xff]
    %v43 = vld [vmem:[%s1 + $0xb0] sm:$0xff]
    %v44 = vld [vmem:[%s1 + $0xb8] sm:$0xff]
    %v45 = vld [vmem:[%s1 + $0xc0] sm:$0xff]
    %v46 = vld [vmem:[%s1 + $0xc8] sm:$0xff]
    %v47 = vld [vmem:[%s1 + $0xd0] sm:$0xff]
    %v48 = vld [vmem:[%s1 + $0xd8] sm:$0xff]
    %v49 = vld [vmem:[%s1 + $0xe0] sm:$0xff]
    %v50 = vld [vmem:[%s1 + $0xe8] sm:$0xff]
    %v51 = vld [vmem:[%s1 + $0xf0] sm:$0xff]
    %v52 = vld [vmem:[%s1 + $0xf8] sm:$0xff]
    %v53 = vld [vmem:[%s1 + $0x100] sm:$0xff]
    %v54 = vld [vmem:[%s1 + $0x108] sm:$0xff]
    %v55 = vld [vmem:[%s1 + $0x110] sm:$0xff]
    %v56 = vld [vmem:[%s1 + $0x118] sm:$0xff]
    %v57 = vld [vmem:[%s1 + $0x120] sm:$0xff]
    %v58 = vld [vmem:[%s1 + $0x128] sm:$0xff]
    %v59 = vld [vmem:[%s1 + $0x130] sm:$0xff]
    %v60 = vld [vmem:[%s1 + $0x138] sm:$0xff]
    %v61 = vld [vmem:[%s1 + $0x140] sm:$0xff]
    %v62 = vld [vmem:[%s1 + $0x148] sm:$0xff]
    %v63 = vld [vmem:[%s1 + $0x150] sm:$0xff]
    %v64 = vld [vmem:[%s1 + $0x158] sm:$0xff]
    %v65 = vld [vmem:[%s1 + $0x160] sm:$0xff]
    %v66 = vld [vmem:[%s1 + $0x168] sm:$0xff]
    %v67 = vld [vmem:[%s1 + $0x170] sm:$0xff]
    %v68 = vld [vmem:[%s1 + $0x178] sm:$0xff]
    %v69 = vld [vmem:[%s2] sm:$0x3f]
    %v71 = vlaneseq
    %v72 = vshrl.u32 %v71, 7
    %v73 = vsub.s32 0, %v72
    %v74 = vrot.slane %v69, %v73
    %v75 = vlaneseq
    %v76 = vshrl.u32 %v75, 7
    %v77 = vsub.s32 1, %v76
    %v78 = vrot.slane %v69, %v77
    %v79 = vlaneseq
    %v80 = vshrl.u32 %v79, 7
    %v81 = vsub.s32 2, %v80
    %v82 = vrot.slane %v69, %v81
    %v83 = vlaneseq
    %v84 = vshrl.u32 %v83, 7
    %v85 = vsub.s32 3, %v84
    %v86 = vrot.slane %v69, %v85
    %v87 = vlaneseq
    %v88 = vshrl.u32 %v87, 7
    %v89 = vsub.s32 4, %v88
    %v90 = vrot.slane %v69, %v89
    %v91 = vlaneseq
    %v92 = vshrl.u32 %v91, 7
    %v93 = vsub.s32 5, %v92
    %v94 = vrot.slane %v69, %v93
    %v149 = vunpack.c.l.b16 %v21
    %v150 = vunpack.c.h.b16 %v21
    %v151 = vunpack.c.l.b16 %v22
    %v152 = vunpack.c.h.b16 %v22
    %v153 = vunpack.c.l.b16 %v23
    %v154 = vunpack.c.h.b16 %v23
    %v155 = vunpack.c.l.b16 %v24
    %v156 = vunpack.c.h.b16 %v24
    %v157 = vunpack.c.l.b16 %v25
    %v158 = vunpack.c.h.b16 %v25
    %v159 = vunpack.c.l.b16 %v26
    %v160 = vunpack.c.h.b16 %v26
    %v161 = vunpack.c.l.b16 %v27
    %v162 = vunpack.c.h.b16 %v27
    %v163 = vunpack.c.l.b16 %v28
    %v164 = vunpack.c.h.b16 %v28
    %v165 = vunpack.c.l.b16 %v29
    %v166 = vunpack.c.h.b16 %v29
    %v167 = vunpack.c.l.b16 %v30
    %v168 = vunpack.c.h.b16 %v30
    %v169 = vunpack.c.l.b16 %v31
    %v170 = vunpack.c.h.b16 %v31
    %v171 = vunpack.c.l.b16 %v32
    %v172 = vunpack.c.h.b16 %v32
    %v173 = vunpack.c.l.b16 %v33
    %v174 = vunpack.c.h.b16 %v33
    %v175 = vunpack.c.l.b16 %v34
    %v176 = vunpack.c.h.b16 %v34
    %v177 = vunpack.c.l.b16 %v35
    %v178 = vunpack.c.h.b16 %v35
    %v179 = vunpack.c.l.b16 %v36
    %v180 = vunpack.c.h.b16 %v36
    %v181 = vunpack.c.l.b16 %v37
    %v182 = vunpack.c.h.b16 %v37
    %v183 = vunpack.c.l.b16 %v38
    %v184 = vunpack.c.h.b16 %v38
    %v185 = vunpack.c.l.b16 %v39
    %v186 = vunpack.c.h.b16 %v39
    %v187 = vunpack.c.l.b16 %v40
    %v188 = vunpack.c.h.b16 %v40
    %v189 = vunpack.c.l.b16 %v41
    %v190 = vunpack.c.h.b16 %v41
    %v191 = vunpack.c.l.b16 %v42
    %v192 = vunpack.c.h.b16 %v42
    %v193 = vunpack.c.l.b16 %v43
    %v194 = vunpack.c.h.b16 %v43
    %v195 = vunpack.c.l.b16 %v44
    %v196 = vunpack.c.h.b16 %v44
    %v197 = vunpack.c.l.b16 %v45
    %v198 = vunpack.c.h.b16 %v45
    %v199 = vunpack.c.l.b16 %v46
    %v200 = vunpack.c.h.b16 %v46
    %v201 = vunpack.c.l.b16 %v47
    %v202 = vunpack.c.h.b16 %v47
    %v203 = vunpack.c.l.b16 %v48
    %v204 = vunpack.c.h.b16 %v48
    %v205 = vunpack.c.l.b16 %v49
    %v206 = vunpack.c.h.b16 %v49
    %v207 = vunpack.c.l.b16 %v50
    %v208 = vunpack.c.h.b16 %v50
    %v209 = vunpack.c.l.b16 %v51
    %v210 = vunpack.c.h.b16 %v51
    %v211 = vunpack.c.l.b16 %v52
    %v212 = vunpack.c.h.b16 %v52
    %v213 = vunpack.c.l.b16 %v53
    %v214 = vunpack.c.h.b16 %v53
    %v215 = vunpack.c.l.b16 %v54
    %v216 = vunpack.c.h.b16 %v54
    %v217 = vunpack.c.l.b16 %v55
    %v218 = vunpack.c.h.b16 %v55
    %v219 = vunpack.c.l.b16 %v56
    %v220 = vunpack.c.h.b16 %v56
    %v221 = vunpack.c.l.b16 %v57
    %v222 = vunpack.c.h.b16 %v57
    %v223 = vunpack.c.l.b16 %v58
    %v224 = vunpack.c.h.b16 %v58
    %v225 = vunpack.c.l.b16 %v59
    %v226 = vunpack.c.h.b16 %v59
    %v227 = vunpack.c.l.b16 %v60
    %v228 = vunpack.c.h.b16 %v60
    %v229 = vunpack.c.l.b16 %v61
    %v230 = vunpack.c.h.b16 %v61
    %v231 = vunpack.c.l.b16 %v62
    %v232 = vunpack.c.h.b16 %v62
    %v233 = vunpack.c.l.b16 %v63
    %v234 = vunpack.c.h.b16 %v63
    %v235 = vunpack.c.l.b16 %v64
    %v236 = vunpack.c.h.b16 %v64
    %v237 = vunpack.c.l.b16 %v65
    %v238 = vunpack.c.h.b16 %v65
    %v239 = vunpack.c.l.b16 %v66
    %v240 = vunpack.c.h.b16 %v66
    %v241 = vunpack.c.l.b16 %v67
    %v242 = vunpack.c.h.b16 %v67
    %v243 = vunpack.c.l.b16 %v68
    %v244 = vunpack.c.h.b16 %v68
    %v245 = vpack.c.b16 %v155, %v149
    %v246 = vpack.c.b16 %v156, %v150
    %v247 = vpack.c.b16 %v157, %v151
    %v248 = vpack.c.b16 %v158, %v152
    %v249 = vpack.c.b16 %v159, %v153
    %v250 = vpack.c.b16 %v160, %v154
    %v251 = vpack.c.b16 %v167, %v161
    %v252 = vpack.c.b16 %v168, %v162
    %v253 = vpack.c.b16 %v169, %v163
    %v254 = vpack.c.b16 %v170, %v164
    %v255 = vpack.c.b16 %v171, %v165
    %v256 = vpack.c.b16 %v172, %v166
    %v257 = vpack.c.b16 %v179, %v173
    %v258 = vpack.c.b16 %v180, %v174
    %v259 = vpack.c.b16 %v181, %v175
    %v260 = vpack.c.b16 %v182, %v176
    %v261 = vpack.c.b16 %v183, %v177
    %v262 = vpack.c.b16 %v184, %v178
    %v263 = vpack.c.b16 %v191, %v185
    %v264 = vpack.c.b16 %v192, %v186
    %v265 = vpack.c.b16 %v193, %v187
    %v266 = vpack.c.b16 %v194, %v188
    %v267 = vpack.c.b16 %v195, %v189
    %v268 = vpack.c.b16 %v196, %v190
    %v269 = vpack.c.b16 %v203, %v197
    %v270 = vpack.c.b16 %v204, %v198
    %v271 = vpack.c.b16 %v205, %v199
    %v272 = vpack.c.b16 %v206, %v200
    %v273 = vpack.c.b16 %v207, %v201
    %v274 = vpack.c.b16 %v208, %v202
    %v275 = vpack.c.b16 %v215, %v209
    %v276 = vpack.c.b16 %v216, %v210
    %v277 = vpack.c.b16 %v217, %v211
    %v278 = vpack.c.b16 %v218, %v212
    %v279 = vpack.c.b16 %v219, %v213
    %v280 = vpack.c.b16 %v220, %v214
    %v281 = vpack.c.b16 %v227, %v221
    %v282 = vpack.c.b16 %v228, %v222
    %v283 = vpack.c.b16 %v229, %v223
    %v284 = vpack.c.b16 %v230, %v224
    %v285 = vpack.c.b16 %v231, %v225
    %v286 = vpack.c.b16 %v232, %v226
    %v287 = vpack.c.b16 %v239, %v233
    %v288 = vpack.c.b16 %v240, %v234
    %v289 = vpack.c.b16 %v241, %v235
    %v290 = vpack.c.b16 %v242, %v236
    %v291 = vpack.c.b16 %v243, %v237
    %v292 = vpack.c.b16 %v244, %v238
    %341 = vmatprep.subr.bf16.mxu0 %v246
    %342 = vmatpush1.bf16.msra.mxu0 %v245
    %343 = vmatprep.subr.bf16.mxu0 %v252
    %344 = vmatpush1.bf16.msra.mxu0 %v251
    %345 = vmatprep.subr.bf16.mxu0 %v258
    %346 = vmatpush1.bf16.msra.mxu0 %v257
    %347 = vmatprep.subr.bf16.mxu0 %v264
    %348 = vmatpush1.bf16.msra.mxu0 %v263
    %349 = vmatprep.subr.bf16.mxu0 %v270
    %350 = vmatpush1.bf16.msra.mxu0 %v269
    %351 = vmatprep.subr.bf16.mxu0 %v276
    %352 = vmatpush1.bf16.msra.mxu0 %v275
    %353 = vmatprep.subr.bf16.mxu0 %v282
    %354 = vmatpush1.bf16.msra.mxu0 %v281
    %355 = vmatprep.subr.bf16.mxu0 %v288
    %356 = vmatpush1.bf16.msra.mxu0 %v287
    %357 = vmatprep.subr.bf16.mxu0 0
    %358 = vmatpush1.bf16.msra.mxu0 0
    %359 = vmatprep.subr.bf16.mxu0 0
    %360 = vmatpush1.bf16.msra.mxu0 0
    %361 = vmatprep.subr.bf16.mxu0 0
    %362 = vmatpush1.bf16.msra.mxu0 0
    %363 = vmatprep.subr.bf16.mxu0 0
    %364 = vmatpush1.bf16.msra.mxu0 0
    %365 = vmatprep.subr.bf16.mxu0 0
    %366 = vmatpush1.bf16.msra.mxu0 0
    %367 = vmatprep.subr.bf16.mxu0 0
    %368 = vmatpush1.bf16.msra.mxu0 0
    %369 = vmatprep.subr.bf16.mxu0 0
    %370 = vmatpush1.bf16.msra.mxu0 0
    %371 = vmatprep.subr.bf16.mxu0 0
    %372 = vmatpush1.bf16.msra.mxu0 0
    %373 = vmatprep.mubr.bf16.mxu0 0
    %374 = vmatmul.mubr.bf16.gmra.mrb[0].mxu0 %v20
    %v375 = vpop.f32.mrb[0].mxu0
    %v376 = vadd.f32 %v74, %v375
    %v377 = vpop.f32.mrb[0].mxu0
    %v378 = vadd.f32 %v78, %v377
    %v379 = vpop.f32.mrb[0].mxu0
    %v380 = vpop.f32.mrb[0].mxu0
    %381 = vdwg.mxu0
    %382 = vmatprep.subr.bf16.mxu0 %v248
    %383 = vmatpush1.bf16.msra.mxu0 %v247
    %384 = vmatprep.subr.bf16.mxu0 %v254
    %385 = vmatpush1.bf16.msra.mxu0 %v253
    %386 = vmatprep.subr.bf16.mxu0 %v260
    %387 = vmatpush1.bf16.msra.mxu0 %v259
    %388 = vmatprep.subr.bf16.mxu0 %v266
    %389 = vmatpush1.bf16.msra.mxu0 %v265
    %390 = vmatprep.subr.bf16.mxu0 %v272
    %391 = vmatpush1.bf16.msra.mxu0 %v271
    %392 = vmatprep.subr.bf16.mxu0 %v278
    %393 = vmatpush1.bf16.msra.mxu0 %v277
    %394 = vmatprep.subr.bf16.mxu0 %v284
    %395 = vmatpush1.bf16.msra.mxu0 %v283
    %396 = vmatprep.subr.bf16.mxu0 %v290
    %397 = vmatpush1.bf16.msra.mxu0 %v289
    %398 = vmatprep.subr.bf16.mxu0 0
    %399 = vmatpush1.bf16.msra.mxu0 0
    %400 = vmatprep.subr.bf16.mxu0 0
    %401 = vmatpush1.bf16.msra.mxu0 0
    %402 = vmatprep.subr.bf16.mxu0 0
    %403 = vmatpush1.bf16.msra.mxu0 0
    %404 = vmatprep.subr.bf16.mxu0 0
    %405 = vmatpush1.bf16.msra.mxu0 0
    %406 = vmatprep.subr.bf16.mxu0 0
    %407 = vmatpush1.bf16.msra.mxu0 0
    %408 = vmatprep.subr.bf16.mxu0 0
    %409 = vmatpush1.bf16.msra.mxu0 0
    %410 = vmatprep.subr.bf16.mxu0 0
    %411 = vmatpush1.bf16.msra.mxu0 0
    %412 = vmatprep.subr.bf16.mxu0 0
    %413 = vmatpush1.bf16.msra.mxu0 0
    %414 = vmatprep.mubr.bf16.mxu0 0
    %415 = vmatmul.mubr.bf16.gmra.mrb[0].mxu0 %v20
    %v416 = vpop.f32.mrb[0].mxu0
    %v417 = vadd.f32 %v82, %v416
    %v418 = vpop.f32.mrb[0].mxu0
    %v419 = vadd.f32 %v86, %v418
    %v420 = vpop.f32.mrb[0].mxu0
    %v421 = vpop.f32.mrb[0].mxu0
    %422 = vdwg.mxu0
    %423 = vmatprep.subr.bf16.mxu0 %v250
    %424 = vmatpush1.bf16.msra.mxu0 %v249
    %425 = vmatprep.subr.bf16.mxu0 %v256
    %426 = vmatpush1.bf16.msra.mxu0 %v255
    %427 = vmatprep.subr.bf16.mxu0 %v262
    %428 = vmatpush1.bf16.msra.mxu0 %v261
    %429 = vmatprep.subr.bf16.mxu0 %v268
    %430 = vmatpush1.bf16.msra.mxu0 %v267
    %431 = vmatprep.subr.bf16.mxu0 %v274
    %432 = vmatpush1.bf16.msra.mxu0 %v273
    %433 = vmatprep.subr.bf16.mxu0 %v280
    %434 = vmatpush1.bf16.msra.mxu0 %v279
    %435 = vmatprep.subr.bf16.mxu0 %v286
    %436 = vmatpush1.bf16.msra.mxu0 %v285
    %437 = vmatprep.subr.bf16.mxu0 %v292
    %438 = vmatpush1.bf16.msra.mxu0 %v291
    %439 = vmatprep.subr.bf16.mxu0 0
    %440 = vmatpush1.bf16.msra.mxu0 0
    %441 = vmatprep.subr.bf16.mxu0 0
    %442 = vmatpush1.bf16.msra.mxu0 0
    %443 = vmatprep.subr.bf16.mxu0 0
    %444 = vmatpush1.bf16.msra.mxu0 0
    %445 = vmatprep.subr.bf16.mxu0 0
    %446 = vmatpush1.bf16.msra.mxu0 0
    %447 = vmatprep.subr.bf16.mxu0 0
    %448 = vmatpush1.bf16.msra.mxu0 0
    %449 = vmatprep.subr.bf16.mxu0 0
    %450 = vmatpush1.bf16.msra.mxu0 0
    %451 = vmatprep.subr.bf16.mxu0 0
    %452 = vmatpush1.bf16.msra.mxu0 0
    %453 = vmatprep.subr.bf16.mxu0 0
    %454 = vmatpush1.bf16.msra.mxu0 0
    %455 = vmatprep.mubr.bf16.mxu0 0
    %456 = vmatmul.mubr.bf16.gmra.mrb[0].mxu0 %v20
    %v457 = vpop.f32.mrb[0].mxu0
    %v458 = vadd.f32 %v90, %v457
    %v459 = vpop.f32.mrb[0].mxu0
    %v460 = vadd.f32 %v94, %v459
    %v461 = vpop.f32.mrb[0].mxu0
    %v462 = vpop.f32.mrb[0].mxu0
    %463 = vdwg.mxu0
    %v464 = vpack.c.bf16 %v376, %v376
    %v465 = vpack.c.bf16 %v378, %v378
    %v466 = vpack.c.bf16 %v417, %v417
    %v467 = vpack.c.bf16 %v419, %v419
    %v468 = vpack.c.bf16 %v458, %v458
    %v469 = vpack.c.bf16 %v460, %v460
    %v470 = vtanh.bf16.pop %v464
    %v471 = vtanh.bf16.pop %v465
    %v472 = vtanh.bf16.pop %v466
    %v473 = vtanh.bf16.pop %v467
    %v474 = vtanh.bf16.pop %v468
    %v475 = vtanh.bf16.pop %v469
    %v476 = vld [vmem:[%s3] sm:$0xf]
    %v477 = vld [vmem:[%s3 + $0x4] sm:$0xf]
    %v478 = vld [vmem:[%s3 + $0x8] sm:$0xf]
    %v479 = vld [vmem:[%s3 + $0xc] sm:$0xf]
    %v480 = vld [vmem:[%s3 + $0x10] sm:$0xf]
    %v481 = vld [vmem:[%s3 + $0x14] sm:$0xf]
    %v482 = vld [vmem:[%s3 + $0x18] sm:$0xf]
    %v483 = vld [vmem:[%s3 + $0x1c] sm:$0xf]
    %v484 = vld [vmem:[%s3 + $0x20] sm:$0xf]
    %v485 = vld [vmem:[%s3 + $0x24] sm:$0xf]
    %v486 = vld [vmem:[%s3 + $0x28] sm:$0xf]
    %v487 = vld [vmem:[%s3 + $0x2c] sm:$0xf]
    %v488 = vld [vmem:[%s3 + $0x30] sm:$0xf]
    %v489 = vld [vmem:[%s3 + $0x34] sm:$0xf]
    %v490 = vld [vmem:[%s3 + $0x38] sm:$0xf]
    %v491 = vld [vmem:[%s3 + $0x3c] sm:$0xf]
    %v492 = vld [vmem:[%s3 + $0x40] sm:$0xf]
    %v493 = vld [vmem:[%s3 + $0x44] sm:$0xf]
    %v494 = vld [vmem:[%s3 + $0x48] sm:$0xf]
    %v495 = vld [vmem:[%s3 + $0x4c] sm:$0xf]
    %v496 = vld [vmem:[%s3 + $0x50] sm:$0xf]
    %v497 = vld [vmem:[%s3 + $0x54] sm:$0xf]
    %v498 = vld [vmem:[%s3 + $0x58] sm:$0xf]
    %v499 = vld [vmem:[%s3 + $0x5c] sm:$0xf]
    %v500 = vld [vmem:[%s3 + $0x60] sm:$0xf]
    %v501 = vld [vmem:[%s3 + $0x64] sm:$0xf]
    %v502 = vld [vmem:[%s3 + $0x68] sm:$0xf]
    %v503 = vld [vmem:[%s3 + $0x6c] sm:$0xf]
    %v504 = vld [vmem:[%s3 + $0x70] sm:$0xf]
    %v505 = vld [vmem:[%s3 + $0x74] sm:$0xf]
    %v506 = vld [vmem:[%s3 + $0x78] sm:$0xf]
    %v507 = vld [vmem:[%s3 + $0x7c] sm:$0xf]
    %v508 = vld [vmem:[%s3 + $0x80] sm:$0xf]
    %v509 = vld [vmem:[%s3 + $0x84] sm:$0xf]
    %v510 = vld [vmem:[%s3 + $0x88] sm:$0xf]
    %v511 = vld [vmem:[%s3 + $0x8c] sm:$0xf]
    %v512 = vld [vmem:[%s3 + $0x90] sm:$0xf]
    %v513 = vld [vmem:[%s3 + $0x94] sm:$0xf]
    %v514 = vld [vmem:[%s3 + $0x98] sm:$0xf]
    %v515 = vld [vmem:[%s3 + $0x9c] sm:$0xf]
    %v516 = vld [vmem:[%s3 + $0xa0] sm:$0xf]
    %v517 = vld [vmem:[%s3 + $0xa4] sm:$0xf]
    %v518 = vld [vmem:[%s3 + $0xa8] sm:$0xf]
    %v519 = vld [vmem:[%s3 + $0xac] sm:$0xf]
    %v520 = vld [vmem:[%s3 + $0xb0] sm:$0xf]
    %v521 = vld [vmem:[%s3 + $0xb4] sm:$0xf]
    %v522 = vld [vmem:[%s3 + $0xb8] sm:$0xf]
    %v523 = vld [vmem:[%s3 + $0xbc] sm:$0xf]
    %v524 = vld [vmem:[%s3 + $0xc0] sm:$0xf]
    %v525 = vld [vmem:[%s3 + $0xc4] sm:$0xf]
    %v526 = vld [vmem:[%s3 + $0xc8] sm:$0xf]
    %v527 = vld [vmem:[%s3 + $0xcc] sm:$0xf]
    %v528 = vld [vmem:[%s3 + $0xd0] sm:$0xf]
    %v529 = vld [vmem:[%s3 + $0xd4] sm:$0xf]
    %v530 = vld [vmem:[%s3 + $0xd8] sm:$0xf]
    %v531 = vld [vmem:[%s3 + $0xdc] sm:$0xf]
    %v532 = vld [vmem:[%s3 + $0xe0] sm:$0xf]
    %v533 = vld [vmem:[%s3 + $0xe4] sm:$0xf]
    %v534 = vld [vmem:[%s3 + $0xe8] sm:$0xf]
    %v535 = vld [vmem:[%s3 + $0xec] sm:$0xf]
    %v536 = vld [vmem:[%s3 + $0xf0] sm:$0xf]
    %v537 = vld [vmem:[%s3 + $0xf4] sm:$0xf]
    %v538 = vld [vmem:[%s3 + $0xf8] sm:$0xf]
    %v539 = vld [vmem:[%s3 + $0xfc] sm:$0xf]
    %v540 = vld [vmem:[%s3 + $0x100] sm:$0xf]
    %v541 = vld [vmem:[%s3 + $0x104] sm:$0xf]
    %v542 = vld [vmem:[%s3 + $0x108] sm:$0xf]
    %v543 = vld [vmem:[%s3 + $0x10c] sm:$0xf]
    %v544 = vld [vmem:[%s3 + $0x110] sm:$0xf]
    %v545 = vld [vmem:[%s3 + $0x114] sm:$0xf]
    %v546 = vld [vmem:[%s3 + $0x118] sm:$0xf]
    %v547 = vld [vmem:[%s3 + $0x11c] sm:$0xf]
    %v548 = vld [vmem:[%s3 + $0x120] sm:$0xf]
    %v549 = vld [vmem:[%s3 + $0x124] sm:$0xf]
    %v550 = vld [vmem:[%s3 + $0x128] sm:$0xf]
    %v551 = vld [vmem:[%s3 + $0x12c] sm:$0xf]
    %v552 = vld [vmem:[%s3 + $0x130] sm:$0xf]
    %v553 = vld [vmem:[%s3 + $0x134] sm:$0xf]
    %v554 = vld [vmem:[%s3 + $0x138] sm:$0xf]
    %v555 = vld [vmem:[%s3 + $0x13c] sm:$0xf]
    %v556 = vld [vmem:[%s3 + $0x140] sm:$0xf]
    %v557 = vld [vmem:[%s3 + $0x144] sm:$0xf]
    %v558 = vld [vmem:[%s3 + $0x148] sm:$0xf]
    %v559 = vld [vmem:[%s3 + $0x14c] sm:$0xf]
    %v560 = vld [vmem:[%s3 + $0x150] sm:$0xf]
    %v561 = vld [vmem:[%s3 + $0x154] sm:$0xf]
    %v562 = vld [vmem:[%s3 + $0x158] sm:$0xf]
    %v563 = vld [vmem:[%s3 + $0x15c] sm:$0xf]
    %v564 = vld [vmem:[%s3 + $0x160] sm:$0xf]
    %v565 = vld [vmem:[%s3 + $0x164] sm:$0xf]
    %v566 = vld [vmem:[%s3 + $0x168] sm:$0xf]
    %v567 = vld [vmem:[%s3 + $0x16c] sm:$0xf]
    %v568 = vld [vmem:[%s3 + $0x170] sm:$0xf]
    %v569 = vld [vmem:[%s3 + $0x174] sm:$0xf]
    %v570 = vld [vmem:[%s3 + $0x178] sm:$0xf]
    %v571 = vld [vmem:[%s3 + $0x17c] sm:$0xf]
    %v668 = vunpack.c.l.b16 %v476
    %v669 = vunpack.c.l.b16 %v477
    %v670 = vunpack.c.l.b16 %v478
    %v671 = vunpack.c.l.b16 %v479
    %v672 = vunpack.c.l.b16 %v480
    %v673 = vunpack.c.l.b16 %v481
    %v674 = vunpack.c.l.b16 %v482
    %v675 = vunpack.c.l.b16 %v483
    %v676 = vunpack.c.l.b16 %v484
    %v677 = vunpack.c.l.b16 %v485
    %v678 = vunpack.c.l.b16 %v486
    %v679 = vunpack.c.l.b16 %v487
    %v680 = vunpack.c.l.b16 %v488
    %v681 = vunpack.c.l.b16 %v489
    %v682 = vunpack.c.l.b16 %v490
    %v683 = vunpack.c.l.b16 %v491
    %v684 = vunpack.c.l.b16 %v492
    %v685 = vunpack.c.l.b16 %v493
    %v686 = vunpack.c.l.b16 %v494
    %v687 = vunpack.c.l.b16 %v495
    %v688 = vunpack.c.l.b16 %v496
    %v689 = vunpack.c.l.b16 %v497
    %v690 = vunpack.c.l.b16 %v498
    %v691 = vunpack.c.l.b16 %v499
    %v692 = vunpack.c.l.b16 %v500
    %v693 = vunpack.c.l.b16 %v501
    %v694 = vunpack.c.l.b16 %v502
    %v695 = vunpack.c.l.b16 %v503
    %v696 = vunpack.c.l.b16 %v504
    %v697 = vunpack.c.l.b16 %v505
    %v698 = vunpack.c.l.b16 %v506
    %v699 = vunpack.c.l.b16 %v507
    %v700 = vunpack.c.l.b16 %v508
    %v701 = vunpack.c.l.b16 %v509
    %v702 = vunpack.c.l.b16 %v510
    %v703 = vunpack.c.l.b16 %v511
    %v704 = vunpack.c.l.b16 %v512
    %v705 = vunpack.c.l.b16 %v513
    %v706 = vunpack.c.l.b16 %v514
    %v707 = vunpack.c.l.b16 %v515
    %v708 = vunpack.c.l.b16 %v516
    %v709 = vunpack.c.l.b16 %v517
    %v710 = vunpack.c.l.b16 %v518
    %v711 = vunpack.c.l.b16 %v519
    %v712 = vunpack.c.l.b16 %v520
    %v713 = vunpack.c.l.b16 %v521
    %v714 = vunpack.c.l.b16 %v522
    %v715 = vunpack.c.l.b16 %v523
    %v716 = vunpack.c.l.b16 %v524
    %v717 = vunpack.c.l.b16 %v525
    %v718 = vunpack.c.l.b16 %v526
    %v719 = vunpack.c.l.b16 %v527
    %v720 = vunpack.c.l.b16 %v528
    %v721 = vunpack.c.l.b16 %v529
    %v722 = vunpack.c.l.b16 %v530
    %v723 = vunpack.c.l.b16 %v531
    %v724 = vunpack.c.l.b16 %v532
    %v725 = vunpack.c.l.b16 %v533
    %v726 = vunpack.c.l.b16 %v534
    %v727 = vunpack.c.l.b16 %v535
    %v728 = vunpack.c.l.b16 %v536
    %v729 = vunpack.c.l.b16 %v537
    %v730 = vunpack.c.l.b16 %v538
    %v731 = vunpack.c.l.b16 %v539
    %v732 = vunpack.c.l.b16 %v540
    %v733 = vunpack.c.l.b16 %v541
    %v734 = vunpack.c.l.b16 %v542
    %v735 = vunpack.c.l.b16 %v543
    %v736 = vunpack.c.l.b16 %v544
    %v737 = vunpack.c.l.b16 %v545
    %v738 = vunpack.c.l.b16 %v546
    %v739 = vunpack.c.l.b16 %v547
    %v740 = vunpack.c.l.b16 %v548
    %v741 = vunpack.c.l.b16 %v549
    %v742 = vunpack.c.l.b16 %v550
    %v743 = vunpack.c.l.b16 %v551
    %v744 = vunpack.c.l.b16 %v552
    %v745 = vunpack.c.l.b16 %v553
    %v746 = vunpack.c.l.b16 %v554
    %v747 = vunpack.c.l.b16 %v555
    %v748 = vunpack.c.l.b16 %v556
    %v749 = vunpack.c.l.b16 %v557
    %v750 = vunpack.c.l.b16 %v558
    %v751 = vunpack.c.l.b16 %v559
    %v752 = vunpack.c.l.b16 %v560
    %v753 = vunpack.c.l.b16 %v561
    %v754 = vunpack.c.l.b16 %v562
    %v755 = vunpack.c.l.b16 %v563
    %v756 = vunpack.c.l.b16 %v564
    %v757 = vunpack.c.l.b16 %v565
    %v758 = vunpack.c.l.b16 %v566
    %v759 = vunpack.c.l.b16 %v567
    %v760 = vunpack.c.l.b16 %v568
    %v761 = vunpack.c.l.b16 %v569
    %v762 = vunpack.c.l.b16 %v570
    %v763 = vunpack.c.l.b16 %v571
    %v764 = vpack.c.b16 %v669, %v668
    %v765 = vpack.c.b16 %v671, %v670
    %v766 = vpack.c.b16 %v673, %v672
    %v767 = vpack.c.b16 %v675, %v674
    %v768 = vpack.c.b16 %v677, %v676
    %v769 = vpack.c.b16 %v679, %v678
    %v770 = vpack.c.b16 %v681, %v680
    %v771 = vpack.c.b16 %v683, %v682
    %v772 = vpack.c.b16 %v685, %v684
    %v773 = vpack.c.b16 %v687, %v686
    %v774 = vpack.c.b16 %v689, %v688
    %v775 = vpack.c.b16 %v691, %v690
    %v776 = vpack.c.b16 %v693, %v692
    %v777 = vpack.c.b16 %v695, %v694
    %v778 = vpack.c.b16 %v697, %v696
    %v779 = vpack.c.b16 %v699, %v698
    %v780 = vpack.c.b16 %v701, %v700
    %v781 = vpack.c.b16 %v703, %v702
    %v782 = vpack.c.b16 %v705, %v704
    %v783 = vpack.c.b16 %v707, %v706
    %v784 = vpack.c.b16 %v709, %v708
    %v785 = vpack.c.b16 %v711, %v710
    %v786 = vpack.c.b16 %v713, %v712
    %v787 = vpack.c.b16 %v715, %v714
    %v788 = vpack.c.b16 %v717, %v716
    %v789 = vpack.c.b16 %v719, %v718
    %v790 = vpack.c.b16 %v721, %v720
    %v791 = vpack.c.b16 %v723, %v722
    %v792 = vpack.c.b16 %v725, %v724
    %v793 = vpack.c.b16 %v727, %v726
    %v794 = vpack.c.b16 %v729, %v728
    %v795 = vpack.c.b16 %v731, %v730
    %v796 = vpack.c.b16 %v733, %v732
    %v797 = vpack.c.b16 %v735, %v734
    %v798 = vpack.c.b16 %v737, %v736
    %v799 = vpack.c.b16 %v739, %v738
    %v800 = vpack.c.b16 %v741, %v740
    %v801 = vpack.c.b16 %v743, %v742
    %v802 = vpack.c.b16 %v745, %v744
    %v803 = vpack.c.b16 %v747, %v746
    %v804 = vpack.c.b16 %v749, %v748
    %v805 = vpack.c.b16 %v751, %v750
    %v806 = vpack.c.b16 %v753, %v752
    %v807 = vpack.c.b16 %v755, %v754
    %v808 = vpack.c.b16 %v757, %v756
    %v809 = vpack.c.b16 %v759, %v758
    %v810 = vpack.c.b16 %v761, %v760
    %v811 = vpack.c.b16 %v763, %v762
    %860 = vmatprep.subr.bf16.mxu0 0
    %861 = vmatpush1.bf16.msra.mxu0 %v764
    %862 = vmatprep.subr.bf16.mxu0 0
    %863 = vmatpush1.bf16.msra.mxu0 %v765
    %864 = vmatprep.subr.bf16.mxu0 0
    %865 = vmatpush1.bf16.msra.mxu0 %v766
    %866 = vmatprep.subr.bf16.mxu0 0
    %867 = vmatpush1.bf16.msra.mxu0 %v767
    %868 = vmatprep.subr.bf16.mxu0 0
    %869 = vmatpush1.bf16.msra.mxu0 %v768
    %870 = vmatprep.subr.bf16.mxu0 0
    %871 = vmatpush1.bf16.msra.mxu0 %v769
    %872 = vmatprep.subr.bf16.mxu0 0
    %873 = vmatpush1.bf16.msra.mxu0 %v770
    %874 = vmatprep.subr.bf16.mxu0 0
    %875 = vmatpush1.bf16.msra.mxu0 %v771
    %876 = vmatprep.subr.bf16.mxu0 0
    %877 = vmatpush1.bf16.msra.mxu0 %v772
    %878 = vmatprep.subr.bf16.mxu0 0
    %879 = vmatpush1.bf16.msra.mxu0 %v773
    %880 = vmatprep.subr.bf16.mxu0 0
    %881 = vmatpush1.bf16.msra.mxu0 %v774
    %882 = vmatprep.subr.bf16.mxu0 0
    %883 = vmatpush1.bf16.msra.mxu0 %v775
    %884 = vmatprep.subr.bf16.mxu0 0
    %885 = vmatpush1.bf16.msra.mxu0 %v776
    %886 = vmatprep.subr.bf16.mxu0 0
    %887 = vmatpush1.bf16.msra.mxu0 %v777
    %888 = vmatprep.subr.bf16.mxu0 0
    %889 = vmatpush1.bf16.msra.mxu0 %v778
    %890 = vmatprep.subr.bf16.mxu0 0
    %891 = vmatpush1.bf16.msra.mxu0 %v779
    %892 = vmatprep.mubr.bf16.mxu0 %v471
    %893 = vmatmul.mubr.bf16.gmra.mrb[0].mxu0 %v470
    %v894 = vpop.f32.mrb[0].mxu0
    %v895 = vadd.f32 0.0, %v894
    %v896 = vpop.f32.mrb[0].mxu0
    %v897 = vpop.f32.mrb[0].mxu0
    %v898 = vpop.f32.mrb[0].mxu0
    %899 = vdwg.mxu0
    %900 = vmatprep.subr.bf16.mxu0 0
    %901 = vmatpush1.bf16.msra.mxu0 %v780
    %902 = vmatprep.subr.bf16.mxu0 0
    %903 = vmatpush1.bf16.msra.mxu0 %v781
    %904 = vmatprep.subr.bf16.mxu0 0
    %905 = vmatpush1.bf16.msra.mxu0 %v782
    %906 = vmatprep.subr.bf16.mxu0 0
    %907 = vmatpush1.bf16.msra.mxu0 %v783
    %908 = vmatprep.subr.bf16.mxu0 0
    %909 = vmatpush1.bf16.msra.mxu0 %v784
    %910 = vmatprep.subr.bf16.mxu0 0
    %911 = vmatpush1.bf16.msra.mxu0 %v785
    %912 = vmatprep.subr.bf16.mxu0 0
    %913 = vmatpush1.bf16.msra.mxu0 %v786
    %914 = vmatprep.subr.bf16.mxu0 0
    %915 = vmatpush1.bf16.msra.mxu0 %v787
    %916 = vmatprep.subr.bf16.mxu0 0
    %917 = vmatpush1.bf16.msra.mxu0 %v788
    %918 = vmatprep.subr.bf16.mxu0 0
    %919 = vmatpush1.bf16.msra.mxu0 %v789
    %920 = vmatprep.subr.bf16.mxu0 0
    %921 = vmatpush1.bf16.msra.mxu0 %v790
    %922 = vmatprep.subr.bf16.mxu0 0
    %923 = vmatpush1.bf16.msra.mxu0 %v791
    %924 = vmatprep.subr.bf16.mxu0 0
    %925 = vmatpush1.bf16.msra.mxu0 %v792
    %926 = vmatprep.subr.bf16.mxu0 0
    %927 = vmatpush1.bf16.msra.mxu0 %v793
    %928 = vmatprep.subr.bf16.mxu0 0
    %929 = vmatpush1.bf16.msra.mxu0 %v794
    %930 = vmatprep.subr.bf16.mxu0 0
    %931 = vmatpush1.bf16.msra.mxu0 %v795
    %932 = vmatprep.mubr.bf16.mxu0 %v473
    %933 = vmatmul.mubr.bf16.gmra.mrb[0].mxu0 %v472
    %v934 = vpop.f32.mrb[0].mxu0
    %v935 = vadd.f32 %v895, %v934
    %v936 = vpop.f32.mrb[0].mxu0
    %v937 = vpop.f32.mrb[0].mxu0
    %v938 = vpop.f32.mrb[0].mxu0
    %939 = vdwg.mxu0
    %940 = vmatprep.subr.bf16.mxu0 0
    %941 = vmatpush1.bf16.msra.mxu0 %v796
    %942 = vmatprep.subr.bf16.mxu0 0
    %943 = vmatpush1.bf16.msra.mxu0 %v797
    %944 = vmatprep.subr.bf16.mxu0 0
    %945 = vmatpush1.bf16.msra.mxu0 %v798
    %946 = vmatprep.subr.bf16.mxu0 0
    %947 = vmatpush1.bf16.msra.mxu0 %v799
    %948 = vmatprep.subr.bf16.mxu0 0
    %949 = vmatpush1.bf16.msra.mxu0 %v800
    %950 = vmatprep.subr.bf16.mxu0 0
    %951 = vmatpush1.bf16.msra.mxu0 %v801
    %952 = vmatprep.subr.bf16.mxu0 0
    %953 = vmatpush1.bf16.msra.mxu0 %v802
    %954 = vmatprep.subr.bf16.mxu0 0
    %955 = vmatpush1.bf16.msra.mxu0 %v803
    %956 = vmatprep.subr.bf16.mxu0 0
    %957 = vmatpush1.bf16.msra.mxu0 %v804
    %958 = vmatprep.subr.bf16.mxu0 0
    %959 = vmatpush1.bf16.msra.mxu0 %v805
    %960 = vmatprep.subr.bf16.mxu0 0
    %961 = vmatpush1.bf16.msra.mxu0 %v806
    %962 = vmatprep.subr.bf16.mxu0 0
    %963 = vmatpush1.bf16.msra.mxu0 %v807
    %964 = vmatprep.subr.bf16.mxu0 0
    %965 = vmatpush1.bf16.msra.mxu0 %v808
    %966 = vmatprep.subr.bf16.mxu0 0
    %967 = vmatpush1.bf16.msra.mxu0 %v809
    %968 = vmatprep.subr.bf16.mxu0 0
    %969 = vmatpush1.bf16.msra.mxu0 %v810
    %970 = vmatprep.subr.bf16.mxu0 0
    %971 = vmatpush1.bf16.msra.mxu0 %v811
    %972 = vmatprep.mubr.bf16.mxu0 %v475
    %973 = vmatmul.mubr.bf16.gmra.mrb[0].mxu0 %v474
    %v974 = vpop.f32.mrb[0].mxu0
    %v975 = vadd.f32 %v935, %v974
    %v976 = vpop.f32.mrb[0].mxu0
    %v977 = vpop.f32.mrb[0].mxu0
    %v978 = vpop.f32.mrb[0].mxu0
    %979 = vdwg.mxu0
    %vm980 = vcmask 130048
    %981 = vst.msk [vmem:[#allocation2] sm:$0xff] %vm980, %v975
    // Predicated region
    $region18: #{tpu_custom_call.1} parent=1 // pred_check
      _
    $region19: #{tpu_custom_call.1} parent=1 // pred_check_branch
      %983 = sbr.rel (0) target = $region21
    $region20: #{tpu_custom_call.1} parent=1 // pred_region
      %s985 = ssub.s32 128, 128
      %986 = vsyncadd [#allocation3], %s985
      %s988 = sshll.u32 [#allocation2], 4
      %s989 = int_to_ptr.vmem [resolvable:$true] %s988
      %991 = dma.vmem_to_hbm [thread:$0]  %s989, 128, %s4, [#allocation3]
    $region21: #{tpu_custom_call.1} parent=1 // pred_fallthru
      _
    // Predicated region
    $region22: #{tpu_custom_call.1} parent=1 // pred_check
      _
    $region23: #{tpu_custom_call.1} parent=1 // pred_check_branch
      %993 = sbr.rel (0) target = $region25
    $region24: #{tpu_custom_call.1} parent=1 // pred_region
      %994 = dma.done [#allocation3], 128
    $region25: #{tpu_custom_call.1} parent=1 // pred_fallthru
      _
    %995 = vsyncpa [#allocation3], 1

</llo_original>
